<compile_context>
chip_gen: v7x
topology: tpu7x:2x2x1
jax: 0.10.0
libtpu: 0.0.40
codegen_flags: <defaults>
</compile_context>

<pallas_src>
import jax
import jax.numpy as jnp
from jax.experimental import pallas as pl
from jax.experimental.pallas import tpu as pltpu

_MIB = 1024 * 1024


def _round_up(x, m):
    return ((x + m - 1) // m) * m


def _pick_tk(nf, cap=2048):
    """Largest 128-multiple K tile <= cap; prefer one that divides nf exactly
    so the activation never needs a per-call K pad."""
    if nf % 128 == 0:
        if nf <= cap:
            return nf
        for cand in range(cap, 0, -128):
            if nf % cand == 0:
                return cand
    return min(_round_up(nf, 128), cap)


def _pick_tn(T, cap=512):
    """128-multiple N tile <= cap minimizing padded T (ties -> larger tile)."""
    best_tn, best_pad = 128, _round_up(T, 128)
    for tn in range(256, cap + 1, 128):
        Tp = _round_up(T, tn)
        if Tp < best_pad or (Tp == best_pad and tn > best_tn):
            best_tn, best_pad = tn, Tp
    return best_tn


def prepare_flatten_head_params(weight, bias, *, tn=None, tk=None, stream_dtype=None):
    """One-time (init-time) layout transform of the nn.Linear parameters.

    weight: [target_window, nf]  (PyTorch layout) -> transposed+padded [K_pad, T_pad]
    bias:   [target_window]                       -> padded [1, T_pad]

    stream_dtype: optionally cast the streamed weight (e.g. jnp.bfloat16 on
    v5e to halve the HBM-bound weight bytes; MXU still accumulates in f32).
    """
    T, nf = weight.shape
    if tn is None:
        tn = _pick_tn(T)
    if tk is None:
        tk = _pick_tk(nf)
    T_pad = _round_up(T, tn)
    K_pad = _round_up(nf, tk)

    # (T, nf) -> (nf, T): kernel contraction becomes a plain MXU matmul with
    # no recurring per-tile XLU transpose.
    w = weight.T
    if stream_dtype is not None:
        w = w.astype(stream_dtype)
    if (K_pad != nf) or (T_pad != T):
        w = jnp.pad(w, ((0, K_pad - nf), (0, T_pad - T)))
    b = bias
    if T_pad != T:
        b = jnp.pad(b, ((0, T_pad - T),))
    return {
        "w": w,
        "b": b.reshape(1, T_pad),
        "T": T,
        "nf": nf,
        "tn": tn,
        "tk": tk,
        "T_pad": T_pad,
        "K_pad": K_pad,
    }


def _flatten_head_kernel_acc(x_ref, w_ref, b_ref, o_ref, acc_ref):
    # x_ref: (tm, tk), w_ref: (tk, tn), b_ref: (1, tn), o_ref/acc_ref: (tm, tn)
    k = pl.program_id(2)

    @pl.when(k == 0)
    def _init():
        # Re-zeroed at the start of every (i, j) output block: required for
        # correctness with "parallel" M/N semantics sharing this scratch.
        acc_ref[...] = jnp.zeros_like(acc_ref)

    x = x_ref[...]
    if x.dtype != w_ref.dtype:  # only when streaming a narrower weight dtype
        x = x.astype(w_ref.dtype)
    acc_ref[...] += jnp.dot(x, w_ref[...], preferred_element_type=jnp.float32)

    @pl.when(k == pl.num_programs(2) - 1)
    def _finalize():
        # Bias added once, in f32.  Dropout(p=0) => identity.
        o_ref[...] = (acc_ref[...] + b_ref[...].astype(jnp.float32)).astype(o_ref.dtype)


def _flatten_head_kernel_single(x_ref, w_ref, b_ref, o_ref):
    # Single K step: no accumulator scratch needed.
    x = x_ref[...]
    if x.dtype != w_ref.dtype:
        x = x.astype(w_ref.dtype)
    o_ref[...] = (
        jnp.dot(x, w_ref[...], preferred_element_type=jnp.float32)
        + b_ref[...].astype(jnp.float32)
    ).astype(o_ref.dtype)


def flatten_head(x, params, *, tm=None):
    """FlattenHead forward.

    x:      [B, n_vars, d_model, patch_num]
    params: output of prepare_flatten_head_params (init-time weight layout)
    returns [B, n_vars, target_window]
    """
    B, C, D, P = x.shape
    nf = D * P
    assert nf == params["nf"], "weight was prepared for a different nf"
    T, tn, tk = params["T"], params["tn"], params["tk"]
    T_pad, K_pad = params["T_pad"], params["K_pad"]
    w, b2d = params["w"], params["b"]
    M = B * C

    # nn.Flatten(start_dim=-2): [B, C, D, P] -> [B*C, nf]  (glue, outside kernel)
    x2d = x.reshape(M, nf)

    if tm is None:
        tm = min(_round_up(M, 8), 512)
    M_pad = _round_up(M, tm)

    # v7x megacore: avoid a (1, 1, K) grid (only the "arbitrary" axis > 1
    # would idle the second TensorCore).  Split N (keeps stores lane-dense)
    # or M into two "parallel" blocks when the padded extents allow it.
    if (M_pad // tm == 1) and (T_pad // tn == 1):
        if T_pad >= 256 and T_pad % 256 == 0:
            tn = T_pad // 2
        elif M_pad >= 16 and M_pad % 16 == 0:
            tm = M_pad // 2

    # Pad the activation only when necessary (zeros contribute nothing to the
    # K reduction; padded M rows are sliced off below).  Weight/bias were
    # padded once at init time.
    if (M_pad != M) or (K_pad != nf):
        x2d = jnp.pad(x2d, ((0, M_pad - M), (0, K_pad - nf)))

    m_blocks = M_pad // tm
    n_blocks = T_pad // tn
    k_blocks = K_pad // tk
    grid = (m_blocks, n_blocks, k_blocks)

    x_item = jnp.dtype(x2d.dtype).itemsize
    w_item = jnp.dtype(w.dtype).itemsize
    b_item = jnp.dtype(b2d.dtype).itemsize
    o_item = jnp.dtype(x.dtype).itemsize

    # Pure weight-streaming regime (one output tile, multi-step K reduction):
    # triple-buffer the weight stream to smooth HBM DMA jitter.
    weight_buffers = 3 if (m_blocks == 1 and n_blocks == 1 and k_blocks >= 3) else 2
    if weight_buffers == 3:
        w_spec = pl.BlockSpec((tk, tn), lambda i, j, k: (k, j),
                              pipeline_mode=pl.Buffered(3))
    else:
        w_spec = pl.BlockSpec((tk, tn), lambda i, j, k: (k, j))

    multi_k = k_blocks > 1
    kernel = _flatten_head_kernel_acc if multi_k else _flatten_head_kernel_single
    scratch = [pltpu.VMEM((tm, tn), jnp.float32)] if multi_k else []

    # VMEM budget with headroom.  Tile caps keep the working set well under
    # v7x's 64 MiB physical VMEM (v5e/v6e have 128 MiB); the 48 MiB cap keeps
    # this config legal on every generation.
    est = (2 * tm * tk * x_item                    # pipelined activation tiles
           + weight_buffers * tk * tn * w_item     # pipelined weight tiles
           + 2 * tn * b_item                       # pipelined bias tiles
           + 2 * tm * tn * o_item                  # pipelined output tiles
           + (tm * tn * 4 if multi_k else 0))      # f32 accumulator
    vmem_limit = int(min(max(2 * est, 16 * _MIB), 48 * _MIB))

    # Advisory cost estimate for XLA's scheduler.
    cost = pl.CostEstimate(
        flops=2 * M * nf * T,
        transcendentals=0,
        bytes_accessed=(n_blocks * M_pad * K_pad * x_item
                        + m_blocks * K_pad * T_pad * w_item
                        + M_pad * T_pad * o_item
                        + T_pad * b_item),
    )

    out2d = pl.pallas_call(
        kernel,
        out_shape=jax.ShapeDtypeStruct((M_pad, T_pad), x.dtype),
        grid_spec=pltpu.PrefetchScalarGridSpec(
            num_scalar_prefetch=0,
            grid=grid,
            in_specs=[
                pl.BlockSpec((tm, tk), lambda i, j, k: (i, k)),   # activation
                w_spec,                                           # weight (nf, T)
                pl.BlockSpec((1, tn), lambda i, j, k: (0, j)),    # bias
            ],
            out_specs=pl.BlockSpec((tm, tn), lambda i, j, k: (i, j)),
            scratch_shapes=scratch,
        ),
        compiler_params=pltpu.CompilerParams(
            dimension_semantics=("parallel", "parallel", "arbitrary"),
            vmem_limit_bytes=vmem_limit,
        ),
        cost_estimate=cost,
    )(x2d, w, b2d)

    return out2d[:M, :T].reshape(B, C, T)


def _reference(x, weight, bias):
    B, C, D, P = x.shape
    nf = D * P
    return x.reshape(B, C, nf) @ weight.T + bias


if __name__ == "__main__":
    key = jax.random.PRNGKey(0)

    # --- Test 1: small aligned-ish shapes (single tile per axis) -------------
    B, C, D, P = 2, 4, 16, 16            # batch, n_vars, d_model, patch_num
    nf = D * P                           # 256
    target_window = 96

    k1, k2, k3, key = jax.random.split(key, 4)
    x = jax.random.normal(k1, (B, C, D, P), dtype=jnp.float32)
    weight = jax.random.normal(k2, (target_window, nf), dtype=jnp.float32) * 0.05
    bias = jax.random.normal(k3, (target_window,), dtype=jnp.float32) * 0.05

    params = prepare_flatten_head_params(weight, bias)    # one-time init
    out = jax.block_until_ready(flatten_head(x, params))
    ref = _reference(x, weight, bias)
    assert out.shape == (B, C, target_window)
    assert jnp.allclose(out, ref, atol=1e-4, rtol=1e-4)

    # --- Test 2: non-multiple shapes, forced multi-tile (M, N, K) grid -------
    B2, C2, D2, P2 = 3, 5, 24, 10        # M = 15, nf = 240 (needs K pad)
    nf2 = D2 * P2
    tw2 = 200

    k4, k5, k6, key = jax.random.split(key, 4)
    x2 = jax.random.normal(k4, (B2, C2, D2, P2), dtype=jnp.float32)
    w2 = jax.random.normal(k5, (tw2, nf2), dtype=jnp.float32) * 0.05
    b2 = jax.random.normal(k6, (tw2,), dtype=jnp.float32) * 0.05

    params2 = prepare_flatten_head_params(w2, b2, tn=128, tk=128)
    out2 = jax.block_until_ready(flatten_head(x2, params2, tm=8))
    ref2 = _reference(x2, w2, b2)
    assert out2.shape == (B2, C2, tw2)
    assert jnp.allclose(out2, ref2, atol=1e-4, rtol=1e-4)

    # --- Test 3: weight-streaming regime (small M, large nf) -----------------
    # Exercises the multi-step K accumulator + Buffered(3) weight stream.
    B3, C3, D3, P3 = 2, 4, 48, 128       # M = 8, nf = 6144
    nf3 = D3 * P3
    tw3 = 128

    k7, k8, k9, _ = jax.random.split(key, 4)
    x3 = jax.random.normal(k7, (B3, C3, D3, P3), dtype=jnp.float32)
    w3 = jax.random.normal(k8, (tw3, nf3), dtype=jnp.float32) * 0.05
    b3 = jax.random.normal(k9, (tw3,), dtype=jnp.float32) * 0.05

    params3 = prepare_flatten_head_params(w3, b3)         # tk=2048 -> 3 K steps
    out3 = jax.block_until_ready(flatten_head(x3, params3))
    ref3 = _reference(x3, w3, b3)
    assert out3.shape == (B3, C3, tw3)
    assert jnp.allclose(out3, ref3, atol=1e-2, rtol=1e-2)

    print("KERNEL_OK")
</pallas_src>

<mosaic_0001>
module attributes {stable_mosaic.version = 11 : i64} {
  func.func @_flatten_head_kernel_single(%arg0: i32, %arg1: i32, %arg2: i32, %arg3: memref<8x256xf32, #tpu.memory_space<vmem>>, %arg4: memref<256x128xf32, #tpu.memory_space<vmem>>, %arg5: memref<1x128xf32, #tpu.memory_space<vmem>>, %arg6: memref<8x128xf32, #tpu.memory_space<vmem>>) attributes {dimension_semantics = [#tpu.dimension_semantics<parallel>, #tpu.dimension_semantics<parallel>, #tpu.dimension_semantics<arbitrary>], iteration_bounds = array<i64: 1, 1, 1>, scalar_prefetch = 0 : i64, scratch_operands = 0 : i64, tpu.core_type = #tpu.core_type<tc>, window_params = [{transform_indices = @transform_0, window_bounds = array<i64: 8, 256>}, {transform_indices = @transform_1, window_bounds = array<i64: 256, 128>}, {transform_indices = @transform_2, window_bounds = array<i64: 1, 128>}, {transform_indices = @transform_3, window_bounds = array<i64: 8, 128>}]} {
    %c0 = arith.constant 0 : index
    %c0_0 = arith.constant 0 : index
    %0 = vector.load %arg3[%c0, %c0_0] : memref<8x256xf32, #tpu.memory_space<vmem>>, vector<8x256xf32>
    %c0_1 = arith.constant 0 : index
    %c0_2 = arith.constant 0 : index
    %1 = vector.load %arg4[%c0_1, %c0_2] : memref<256x128xf32, #tpu.memory_space<vmem>>, vector<256x128xf32>
    %cst = arith.constant dense<0.000000e+00> : vector<8x128xf32>
    %2 = tpu.matmul %0, %1, %cst {dimension_numbers = #tpu.dot_dimension_numbers<[1], [0], [0], [1], [0, 0, 1, 1], [], []>} : vector<8x256xf32>, vector<256x128xf32>, vector<8x128xf32> -> vector<8x128xf32>
    %c0_3 = arith.constant 0 : index
    %c0_4 = arith.constant 0 : index
    %3 = vector.load %arg5[%c0_3, %c0_4] : memref<1x128xf32, #tpu.memory_space<vmem>>, vector<1x128xf32>
    %4 = vector.broadcast %3 : vector<1x128xf32> to vector<8x128xf32>
    %5 = arith.addf %2, %4 : vector<8x128xf32>
    %c0_5 = arith.constant 0 : index
    %c0_6 = arith.constant 0 : index
    %6 = vector.load %arg6[%c0_5, %c0_6] : memref<8x128xf32, #tpu.memory_space<vmem>>, vector<8x128xf32>
    tpu.vector_store %arg6[%c0_5, %c0_6], %5 {strides = array<i32>} : memref<8x128xf32, #tpu.memory_space<vmem>>, vector<8x128xf32>,
    return
  }
  func.func @transform_0(%arg0: i32, %arg1: i32, %arg2: i32) -> (i32, i32) {
    %c0_i32 = arith.constant 0 : i32
    return %arg0, %arg2 : i32, i32
  }
  func.func @transform_1(%arg0: i32, %arg1: i32, %arg2: i32) -> (i32, i32) {
    %c0_i32 = arith.constant 0 : i32
    return %arg2, %arg1 : i32, i32
  }
  func.func @transform_2(%arg0: i32, %arg1: i32, %arg2: i32) -> (i32, i32) {
    %c0_i32 = arith.constant 0 : i32
    %c0_i32_0 = arith.constant 0 : i32
    return %c0_i32, %arg1 : i32, i32
  }
  func.func @transform_3(%arg0: i32, %arg1: i32, %arg2: i32) -> (i32, i32) {
    %c0_i32 = arith.constant 0 : i32
    return %arg0, %arg1 : i32, i32
  }
}

</mosaic_0001>

<llo_original>
// kernel: tpu_custom_call.1
$region0: #{tpu_custom_call.1}
  #allocation0 [shape = 'u32[]', space=smem, size = 0x4, offset = 0x4, fixed_abs, tag = 'smem constant byte address 0x4 - core index']
  #allocation1 [shape = 'u32[144,128]{1,0:T(1,128)}', space=vmem, size = 0x12000, scoped, tag = 'internal scratch']
  %s0 = inlined_call_operand.hbm [shape: f32[8,256], index: 0, kind: input, shape index: {}]
  %s1 = inlined_call_operand.hbm [shape: f32[256,128], index: 1, kind: input, shape index: {}]
  %s2 = inlined_call_operand.vmem [shape: f32[1,128], index: 2, kind: input, shape index: {}]
  %s3 = inlined_call_operand.hbm [shape: f32[8,128], index: 3, kind: output, shape index: {}]
  %s4 = sld [smem:[#allocation0]]
  $region30: #{tpu_custom_call.1} parent=0
    _
  %s6 = ssub.s32 1, %s4
  %s7 = scalar_select 0, %s6, %s4
  $region1: #{tpu_custom_call.1} parent=0
    #allocation2 [shape = 'u8[8192]{0}', space=vmem, size = 0x2000, scoped, tag = 'input window, operand 0, single buffered']
    #allocation3 [shape = 's32[1]{0}', space=sflag, size = 0x4, scoped, tag = 'scoped memory for tpu_custom_call.1']
    #allocation4 [shape = 's32[1]{0}', space=sflag, size = 0x4, scoped, tag = 'scoped memory for tpu_custom_call.1']
    #allocation5 [shape = 'u8[131072]{0}', space=vmem, size = 0x20000, scoped, tag = 'input window, operand 1, single buffered']
    #allocation6 [shape = 's32[1]{0}', space=sflag, size = 0x4, scoped, tag = 'scoped memory for tpu_custom_call.1']
    #allocation7 [shape = 'u8[4096]{0}', space=vmem, size = 0x1000, scoped, tag = 'output window, operand 0, single buffered']
    %8 = vsyncpa [#allocation3], 0
    %9 = vsyncpa [#allocation6], 0
    %10 = vsyncpa [#allocation4], 0
    // Predicated region
    $region2: #{tpu_custom_call.1} parent=1 // pred_check
      _
    $region3: #{tpu_custom_call.1} parent=1 // pred_check_branch
      %12 = sbr.rel (0) target = $region5
    $region4: #{tpu_custom_call.1} parent=1 // pred_region
      %s14 = ssub.s32 256, 256
      %15 = vsyncadd [#allocation3], %s14
      %s17 = sshll.u32 [#allocation2], 4
      %s18 = int_to_ptr.vmem [resolvable:$true] %s17
      %20 = dma.hbm_to_vmem [thread:$0]  %s0, 256, %s18, [#allocation3]
    $region5: #{tpu_custom_call.1} parent=1 // pred_fallthru
      _
    // Predicated region
    $region6: #{tpu_custom_call.1} parent=1 // pred_check
      _
    $region7: #{tpu_custom_call.1} parent=1 // pred_check_branch
      %22 = sbr.rel (0) target = $region9
    $region8: #{tpu_custom_call.1} parent=1 // pred_region
      %s24 = ssub.s32 4096, 4096
      %25 = vsyncadd [#allocation6], %s24
      %s26 = sshll.u32 [#allocation5], 4
      %s27 = int_to_ptr.vmem [resolvable:$true] %s26
      %32 = dma.hbm_to_vmem [thread:$0]  %s1, 4096, %s27, [#allocation6], 128, 128, 8
    $region9: #{tpu_custom_call.1} parent=1 // pred_fallthru
      _
    // Predicated region
    $region10: #{tpu_custom_call.1} parent=1 // pred_check
      _
    $region11: #{tpu_custom_call.1} parent=1 // pred_check_branch
      %34 = sbr.rel (0) target = $region13
    $region12: #{tpu_custom_call.1} parent=1 // pred_region
      _
    $region13: #{tpu_custom_call.1} parent=1 // pred_fallthru
      _
    // Predicated region
    $region14: #{tpu_custom_call.1} parent=1 // pred_check
      _
    $region15: #{tpu_custom_call.1} parent=1 // pred_check_branch
      %36 = sbr.rel (0) target = $region17
    $region16: #{tpu_custom_call.1} parent=1 // pred_region
      %37 = dma.done [#allocation3], 256
    $region17: #{tpu_custom_call.1} parent=1 // pred_fallthru
      _
    // Predicated region
    $region18: #{tpu_custom_call.1} parent=1 // pred_check
      _
    $region19: #{tpu_custom_call.1} parent=1 // pred_check_branch
      %39 = sbr.rel (0) target = $region21
    $region20: #{tpu_custom_call.1} parent=1 // pred_region
      %40 = dma.done [#allocation6], 4096
    $region21: #{tpu_custom_call.1} parent=1 // pred_fallthru
      _
    %v41 = vld [vmem:[#allocation2] sm:$0xff]
    %v42 = vld [vmem:[#allocation2 + $0x8] sm:$0xff]
    %v43 = vld [vmem:[#allocation5] sm:$0xff]
    %v44 = vld [vmem:[#allocation5 + $0x8] sm:$0xff]
    %v45 = vld [vmem:[#allocation5 + $0x10] sm:$0xff]
    %v46 = vld [vmem:[#allocation5 + $0x18] sm:$0xff]
    %v47 = vld [vmem:[#allocation5 + $0x20] sm:$0xff]
    %v48 = vld [vmem:[#allocation5 + $0x28] sm:$0xff]
    %v49 = vld [vmem:[#allocation5 + $0x30] sm:$0xff]
    %v50 = vld [vmem:[#allocation5 + $0x38] sm:$0xff]
    %v51 = vld [vmem:[#allocation5 + $0x40] sm:$0xff]
    %v52 = vld [vmem:[#allocation5 + $0x48] sm:$0xff]
    %v53 = vld [vmem:[#allocation5 + $0x50] sm:$0xff]
    %v54 = vld [vmem:[#allocation5 + $0x58] sm:$0xff]
    %v55 = vld [vmem:[#allocation5 + $0x60] sm:$0xff]
    %v56 = vld [vmem:[#allocation5 + $0x68] sm:$0xff]
    %v57 = vld [vmem:[#allocation5 + $0x70] sm:$0xff]
    %v58 = vld [vmem:[#allocation5 + $0x78] sm:$0xff]
    %v59 = vld [vmem:[#allocation5 + $0x80] sm:$0xff]
    %v60 = vld [vmem:[#allocation5 + $0x88] sm:$0xff]
    %v61 = vld [vmem:[#allocation5 + $0x90] sm:$0xff]
    %v62 = vld [vmem:[#allocation5 + $0x98] sm:$0xff]
    %v63 = vld [vmem:[#allocation5 + $0xa0] sm:$0xff]
    %v64 = vld [vmem:[#allocation5 + $0xa8] sm:$0xff]
    %v65 = vld [vmem:[#allocation5 + $0xb0] sm:$0xff]
    %v66 = vld [vmem:[#allocation5 + $0xb8] sm:$0xff]
    %v67 = vld [vmem:[#allocation5 + $0xc0] sm:$0xff]
    %v68 = vld [vmem:[#allocation5 + $0xc8] sm:$0xff]
    %v69 = vld [vmem:[#allocation5 + $0xd0] sm:$0xff]
    %v70 = vld [vmem:[#allocation5 + $0xd8] sm:$0xff]
    %v71 = vld [vmem:[#allocation5 + $0xe0] sm:$0xff]
    %v72 = vld [vmem:[#allocation5 + $0xe8] sm:$0xff]
    %v73 = vld [vmem:[#allocation5 + $0xf0] sm:$0xff]
    %v74 = vld [vmem:[#allocation5 + $0xf8] sm:$0xff]
    %v75 = vld [vmem:[%s2] sm:$0x1]
    %v77 = vlaneseq
    %v78 = vshrl.u32 %v77, 7
    %v79 = vsub.s32 0, %v78
    %v80 = vrot.slane %v75, %v79
    %82 = vmatprep.subr.mxu0 0.0
    %83 = vmatpush1.msra.mxu0 %v43
    %84 = vmatprep.subr.mxu0 0.0
    %85 = vmatpush1.msra.mxu0 %v44
    %86 = vmatprep.subr.mxu0 0.0
    %87 = vmatpush1.msra.mxu0 %v45
    %88 = vmatprep.subr.mxu0 0.0
    %89 = vmatpush1.msra.mxu0 %v46
    %90 = vmatprep.subr.mxu0 0.0
    %91 = vmatpush1.msra.mxu0 %v47
    %92 = vmatprep.subr.mxu0 0.0
    %93 = vmatpush1.msra.mxu0 %v48
    %94 = vmatprep.subr.mxu0 0.0
    %95 = vmatpush1.msra.mxu0 %v49
    %96 = vmatprep.subr.mxu0 0.0
    %97 = vmatpush1.msra.mxu0 %v50
    %98 = vmatprep.subr.mxu0 0.0
    %99 = vmatpush1.msra.mxu0 %v51
    %100 = vmatprep.subr.mxu0 0.0
    %101 = vmatpush1.msra.mxu0 %v52
    %102 = vmatprep.subr.mxu0 0.0
    %103 = vmatpush1.msra.mxu0 %v53
    %104 = vmatprep.subr.mxu0 0.0
    %105 = vmatpush1.msra.mxu0 %v54
    %106 = vmatprep.subr.mxu0 0.0
    %107 = vmatpush1.msra.mxu0 %v55
    %108 = vmatprep.subr.mxu0 0.0
    %109 = vmatpush1.msra.mxu0 %v56
    %110 = vmatprep.subr.mxu0 0.0
    %111 = vmatpush1.msra.mxu0 %v57
    %112 = vmatprep.subr.mxu0 0.0
    %113 = vmatpush1.msra.mxu0 %v58
    %114 = vmatprep.subr.mxu0 0.0
    %115 = vmatpush1.msra.mxu0 %v59
    %116 = vmatprep.subr.mxu0 0.0
    %117 = vmatpush1.msra.mxu0 %v60
    %118 = vmatprep.subr.mxu0 0.0
    %119 = vmatpush1.msra.mxu0 %v61
    %120 = vmatprep.subr.mxu0 0.0
    %121 = vmatpush1.msra.mxu0 %v62
    %122 = vmatprep.subr.mxu0 0.0
    %123 = vmatpush1.msra.mxu0 %v63
    %124 = vmatprep.subr.mxu0 0.0
    %125 = vmatpush1.msra.mxu0 %v64
    %126 = vmatprep.subr.mxu0 0.0
    %127 = vmatpush1.msra.mxu0 %v65
    %128 = vmatprep.subr.mxu0 0.0
    %129 = vmatpush1.msra.mxu0 %v66
    %130 = vmatprep.subr.mxu0 0.0
    %131 = vmatpush1.msra.mxu0 %v67
    %132 = vmatprep.subr.mxu0 0.0
    %133 = vmatpush1.msra.mxu0 %v68
    %134 = vmatprep.subr.mxu0 0.0
    %135 = vmatpush1.msra.mxu0 %v69
    %136 = vmatprep.subr.mxu0 0.0
    %137 = vmatpush1.msra.mxu0 %v70
    %138 = vmatprep.subr.mxu0 0.0
    %139 = vmatpush1.msra.mxu0 %v71
    %140 = vmatprep.subr.mxu0 0.0
    %141 = vmatpush1.msra.mxu0 %v72
    %142 = vmatprep.subr.mxu0 0.0
    %143 = vmatpush1.msra.mxu0 %v73
    %144 = vmatprep.subr.mxu0 0.0
    %145 = vmatpush1.msra.mxu0 %v74
    %146 = vmatprep.mubr.f32.mxu0 %v42
    %147 = vmatmul.mubr.f32.gmra.mrb[0].mxu0 %v41
    %v148 = vpop.f32.mrb[0].mxu0
    %v149 = vadd.f32 %v80, %v148
    %v150 = vpop.f32.mrb[0].mxu0
    %151 = vdwg.mxu0
    %152 = vst [vmem:[#allocation7] sm:$0xff] %v149
    // Predicated region
    $region22: #{tpu_custom_call.1} parent=1 // pred_check
      _
    $region23: #{tpu_custom_call.1} parent=1 // pred_check_branch
      %154 = sbr.rel (0) target = $region25
    $region24: #{tpu_custom_call.1} parent=1 // pred_region
      %s156 = ssub.s32 128, 128
      %157 = vsyncadd [#allocation4], %s156
      %s159 = sshll.u32 [#allocation7], 4
      %s160 = int_to_ptr.vmem [resolvable:$true] %s159
      %162 = dma.vmem_to_hbm [thread:$0]  %s160, 128, %s3, [#allocation4]
    $region25: #{tpu_custom_call.1} parent=1 // pred_fallthru
      _
    // Predicated region
    $region26: #{tpu_custom_call.1} parent=1 // pred_check
      _
    $region27: #{tpu_custom_call.1} parent=1 // pred_check_branch
      %164 = sbr.rel (0) target = $region29
    $region28: #{tpu_custom_call.1} parent=1 // pred_region
      %165 = dma.done [#allocation4], 128
    $region29: #{tpu_custom_call.1} parent=1 // pred_fallthru
      _
    %166 = vsyncpa [#allocation3], 1
    %167 = vsyncpa [#allocation6], 1
    %168 = vsyncpa [#allocation4], 1

</llo_original>
